<compile_context>
chip_gen: v6e
topology: v6e:2x2x1
jax: 0.10.0
libtpu: 0.0.40
codegen_flags: <defaults>
</compile_context>

<pallas_src>
import functools

import jax
import jax.numpy as jnp
from jax import lax
from jax.experimental import pallas as pl
from jax.experimental.pallas import tpu as pltpu


# ---------------------------------------------------------------------------
# Stage 1: fused QKV projection (q pre-scaled by 1/sqrt(d_out)).
# ---------------------------------------------------------------------------
def _qkv_proj_kernel(x_ref, w_ref, q_ref, k_ref, v_ref, *, d_out, scale):
    qkv = jnp.dot(x_ref[...], w_ref[...], preferred_element_type=jnp.float32)
    q_ref[...] = (qkv[:, :d_out] * scale).astype(q_ref.dtype)
    k_ref[...] = qkv[:, d_out:2 * d_out].astype(k_ref.dtype)
    v_ref[...] = qkv[:, 2 * d_out:].astype(v_ref.dtype)


def _qkv_projection(x, w_qkv, d_out, *, tile_m):
    seq, d_in = x.shape
    kernel = functools.partial(
        _qkv_proj_kernel, d_out=d_out, scale=1.0 / float(d_out) ** 0.5)
    out_sds = jax.ShapeDtypeStruct((seq, d_out), jnp.float32)
    return pl.pallas_call(
        kernel,
        out_shape=(out_sds, out_sds, out_sds),
        grid_spec=pltpu.PrefetchScalarGridSpec(
            num_scalar_prefetch=0,
            grid=(seq // tile_m,),
            in_specs=[
                pl.BlockSpec((tile_m, d_in), lambda i: (i, 0)),
                # Constant index_map: fused weight stays VMEM-resident
                # across all row tiles.
                pl.BlockSpec((d_in, 3 * d_out), lambda i: (0, 0)),
            ],
            out_specs=(
                pl.BlockSpec((tile_m, d_out), lambda i: (i, 0)),
                pl.BlockSpec((tile_m, d_out), lambda i: (i, 0)),
                pl.BlockSpec((tile_m, d_out), lambda i: (i, 0)),
            ),
        ),
        compiler_params=pltpu.CompilerParams(
            dimension_semantics=("parallel",)),
    )(x, w_qkv)


# ---------------------------------------------------------------------------
# Stage 2: flash-attention (online softmax, no [S,S] scores materialized).
# ---------------------------------------------------------------------------
def _flash_attn_kernel(q_ref, k_ref, v_ref, o_ref, m_sc, l_sc, acc_sc):
    kv = pl.program_id(1)

    @pl.when(kv == 0)
    def _():
        m_sc[...] = jnp.full_like(m_sc, -jnp.inf)
        l_sc[...] = jnp.zeros_like(l_sc)
        acc_sc[...] = jnp.zeros_like(acc_sc)

    # q was pre-scaled by 1/sqrt(d_out).  Contract the last dims of q and k
    # directly (transposed contraction) so no k.T / XLU transpose is needed.
    s = lax.dot_general(
        q_ref[...], k_ref[...],
        dimension_numbers=(((1,), (1,)), ((), ())),
        preferred_element_type=jnp.float32)                      # [tq, tk]

    m_prev = m_sc[...]
    m_new = jnp.maximum(m_prev, s.max(axis=-1, keepdims=True))
    alpha = jnp.exp(m_prev - m_new)
    p = jnp.exp(s - m_new)
    l_sc[...] = alpha * l_sc[...] + p.sum(axis=-1, keepdims=True)
    acc_sc[...] = alpha * acc_sc[...] + jnp.dot(
        p.astype(v_ref.dtype), v_ref[...],
        preferred_element_type=jnp.float32)
    m_sc[...] = m_new

    @pl.when(kv == pl.num_programs(1) - 1)
    def _():
        inv_l = pl.reciprocal(l_sc[...], approx=True)   # EUP slot, ~free
        o_ref[...] = (acc_sc[...] * inv_l).astype(o_ref.dtype)


def _flash_attention(q, k, v, *, tile_q, tile_kv, out_dtype):
    seq, d_out = q.shape
    return pl.pallas_call(
        _flash_attn_kernel,
        out_shape=jax.ShapeDtypeStruct((seq, d_out), out_dtype),
        grid_spec=pltpu.PrefetchScalarGridSpec(
            num_scalar_prefetch=0,
            grid=(seq // tile_q, seq // tile_kv),
            in_specs=[
                pl.BlockSpec((tile_q, d_out), lambda qi, ki: (qi, 0)),
                pl.BlockSpec((tile_kv, d_out), lambda qi, ki: (ki, 0)),
                pl.BlockSpec((tile_kv, d_out), lambda qi, ki: (ki, 0)),
            ],
            out_specs=pl.BlockSpec((tile_q, d_out), lambda qi, ki: (qi, 0)),
            scratch_shapes=[
                pltpu.VMEM((tile_q, 1), jnp.float32),      # running max  m
                pltpu.VMEM((tile_q, 1), jnp.float32),      # running sum  l
                pltpu.VMEM((tile_q, d_out), jnp.float32),  # output accumulator
            ],
        ),
        compiler_params=pltpu.CompilerParams(
            dimension_semantics=("parallel", "arbitrary")),
    )(q, k, v)


# ---------------------------------------------------------------------------
# Public wrapper (mirrors SelfAttention.forward).
# ---------------------------------------------------------------------------
def _pick_tile(n, target):
    """Largest legal tile <= target that divides n (full dim is always legal)."""
    if n <= target:
        return n
    for t in range(target, 0, -8):
        if t % 8 == 0 and n % t == 0:
            return t
    return n


def self_attention(x, w_query, w_key, w_value, *, max_tile=256):
    seq, d_in = x.shape
    d_out = w_query.shape[1]

    # Fused QKV weight [d_in, 3*d_out]: one MXU matmul instead of three.
    w_qkv = jnp.concatenate([w_query, w_key, w_value], axis=1)

    tile_m = _pick_tile(seq, max_tile)
    tile_q = _pick_tile(seq, max_tile)
    tile_kv = _pick_tile(seq, max_tile)

    q, k, v = _qkv_projection(x, w_qkv, d_out, tile_m=tile_m)
    return _flash_attention(q, k, v, tile_q=tile_q, tile_kv=tile_kv,
                            out_dtype=x.dtype)


def self_attention_ref(x, w_query, w_key, w_value):
    # Pure-JAX reference mirroring the PyTorch forward.
    keys = x @ w_key
    queries = x @ w_query
    values = x @ w_value
    scores = queries @ keys.T
    weights = jax.nn.softmax(scores / (keys.shape[-1] ** 0.5), axis=-1)
    return weights @ values


if __name__ == "__main__":
    seq, d_in, d_out = 8, 16, 32

    key = jax.random.PRNGKey(0)
    kx, kq, kk, kv = jax.random.split(key, 4)

    x = jax.random.normal(kx, (seq, d_in), dtype=jnp.float32)
    # Deterministic "Linear-like" init, stored as [d_in, d_out] for x @ W.
    w_query = jax.random.uniform(kq, (d_in, d_out), jnp.float32, -1.0, 1.0) / jnp.sqrt(d_in)
    w_key   = jax.random.uniform(kk, (d_in, d_out), jnp.float32, -1.0, 1.0) / jnp.sqrt(d_in)
    w_value = jax.random.uniform(kv, (d_in, d_out), jnp.float32, -1.0, 1.0) / jnp.sqrt(d_in)

    out = self_attention(x, w_query, w_key, w_value)
    out = jax.block_until_ready(out)

    ref = self_attention_ref(x, w_query, w_key, w_value)
    assert out.shape == (seq, d_out)
    # Slightly looser tolerance because of the EUP approx reciprocal in softmax.
    assert jnp.allclose(out, ref, atol=5e-3, rtol=5e-3), "mismatch vs reference"

    print("KERNEL_OK")
</pallas_src>

<mosaic_0001>
module attributes {stable_mosaic.version = 11 : i64} {
  func.func @_qkv_proj_kernel(%arg0: i32, %arg1: memref<8x16xf32, #tpu.memory_space<vmem>>, %arg2: memref<16x96xf32, #tpu.memory_space<vmem>>, %arg3: memref<8x32xf32, #tpu.memory_space<vmem>>, %arg4: memref<8x32xf32, #tpu.memory_space<vmem>>, %arg5: memref<8x32xf32, #tpu.memory_space<vmem>>) attributes {dimension_semantics = [#tpu.dimension_semantics<parallel>], iteration_bounds = array<i64: 1>, scalar_prefetch = 0 : i64, scratch_operands = 0 : i64, tpu.core_type = #tpu.core_type<tc>, window_params = [{transform_indices = @transform_0, window_bounds = array<i64: 8, 16>}, {pipeline_mode = #tpu.pipeline_mode<synchronous>, transform_indices = @transform_1, window_bounds = array<i64: 16, 96>}, {transform_indices = @transform_2, window_bounds = array<i64: 8, 32>}, {transform_indices = @transform_3, window_bounds = array<i64: 8, 32>}, {transform_indices = @transform_4, window_bounds = array<i64: 8, 32>}]} {
    %c0 = arith.constant 0 : index
    %c0_0 = arith.constant 0 : index
    %0 = vector.load %arg1[%c0, %c0_0] : memref<8x16xf32, #tpu.memory_space<vmem>>, vector<8x16xf32>
    %c0_1 = arith.constant 0 : index
    %c0_2 = arith.constant 0 : index
    %1 = vector.load %arg2[%c0_1, %c0_2] : memref<16x96xf32, #tpu.memory_space<vmem>>, vector<16x96xf32>
    %cst = arith.constant dense<0.000000e+00> : vector<8x96xf32>
    %2 = tpu.matmul %0, %1, %cst {dimension_numbers = #tpu.dot_dimension_numbers<[1], [0], [0], [1], [0, 0, 1, 1], [], []>} : vector<8x16xf32>, vector<16x96xf32>, vector<8x96xf32> -> vector<8x96xf32>
    %3 = vector.extract_strided_slice %2 {offsets = [0, 0], sizes = [8, 32], strides = [1, 1]} : vector<8x96xf32> to vector<8x32xf32>
    %cst_3 = arith.constant 0.176776692 : f32
    %4 = vector.broadcast %cst_3 : f32 to vector<8x32xf32>
    %5 = arith.mulf %3, %4 : vector<8x32xf32>
    %c0_4 = arith.constant 0 : index
    %c0_5 = arith.constant 0 : index
    %6 = vector.load %arg3[%c0_4, %c0_5] : memref<8x32xf32, #tpu.memory_space<vmem>>, vector<8x32xf32>
    tpu.vector_store %arg3[%c0_4, %c0_5], %5 {strides = array<i32>} : memref<8x32xf32, #tpu.memory_space<vmem>>, vector<8x32xf32>,
    %7 = vector.extract_strided_slice %2 {offsets = [0, 32], sizes = [8, 32], strides = [1, 1]} : vector<8x96xf32> to vector<8x32xf32>
    %c0_6 = arith.constant 0 : index
    %c0_7 = arith.constant 0 : index
    %8 = vector.load %arg4[%c0_6, %c0_7] : memref<8x32xf32, #tpu.memory_space<vmem>>, vector<8x32xf32>
    tpu.vector_store %arg4[%c0_6, %c0_7], %7 {strides = array<i32>} : memref<8x32xf32, #tpu.memory_space<vmem>>, vector<8x32xf32>,
    %9 = vector.extract_strided_slice %2 {offsets = [0, 64], sizes = [8, 32], strides = [1, 1]} : vector<8x96xf32> to vector<8x32xf32>
    %c0_8 = arith.constant 0 : index
    %c0_9 = arith.constant 0 : index
    %10 = vector.load %arg5[%c0_8, %c0_9] : memref<8x32xf32, #tpu.memory_space<vmem>>, vector<8x32xf32>
    tpu.vector_store %arg5[%c0_8, %c0_9], %9 {strides = array<i32>} : memref<8x32xf32, #tpu.memory_space<vmem>>, vector<8x32xf32>,
    return
  }
  func.func @transform_0(%arg0: i32) -> (i32, i32) {
    %c0_i32 = arith.constant 0 : i32
    %c0_i32_0 = arith.constant 0 : i32
    return %arg0, %c0_i32 : i32, i32
  }
  func.func @transform_1(%arg0: i32) -> (i32, i32) {
    %c0_i32 = arith.constant 0 : i32
    %c0_i32_0 = arith.constant 0 : i32
    %c0_i32_1 = arith.constant 0 : i32
    return %c0_i32, %c0_i32_0 : i32, i32
  }
  func.func @transform_2(%arg0: i32) -> (i32, i32) {
    %c0_i32 = arith.constant 0 : i32
    %c0_i32_0 = arith.constant 0 : i32
    return %arg0, %c0_i32 : i32, i32
  }
  func.func @transform_3(%arg0: i32) -> (i32, i32) {
    %c0_i32 = arith.constant 0 : i32
    %c0_i32_0 = arith.constant 0 : i32
    return %arg0, %c0_i32 : i32, i32
  }
  func.func @transform_4(%arg0: i32) -> (i32, i32) {
    %c0_i32 = arith.constant 0 : i32
    %c0_i32_0 = arith.constant 0 : i32
    return %arg0, %c0_i32 : i32, i32
  }
}

</mosaic_0001>

<llo_original>
// kernel: tpu_custom_call.1
$region0: #{tpu_custom_call.1}
  #allocation0 [shape = 'u32[]', space=smem, size = 0x4, offset = 0x4, fixed_abs, tag = 'smem constant byte address 0x4 - core index']
  #allocation1 [shape = 'u32[144,128]{1,0:T(1,128)}', space=vmem, size = 0x12000, scoped, tag = 'internal scratch']
  %s0 = inlined_call_operand.hbm [shape: f32[8,16], index: 0, kind: input, shape index: {}]
  %s1 = inlined_call_operand.hbm [shape: f32[16,96], index: 1, kind: input, shape index: {}]
  %s2 = inlined_call_operand.hbm [shape: f32[8,32], index: 2, kind: output, shape index: {0}]
  %s3 = inlined_call_operand.hbm [shape: f32[8,32], index: 3, kind: output, shape index: {1}]
  %s4 = inlined_call_operand.hbm [shape: f32[8,32], index: 4, kind: output, shape index: {2}]
  %5 = xla_tuple %s2, %s3, %s4
  %s6 = sld [smem:[#allocation0]]
  $region42: #{tpu_custom_call.1} parent=0
    _
  %s8 = ssub.s32 1, %s6
  %s9 = scalar_select 0, %s8, %s6
  $region1: #{tpu_custom_call.1} parent=0
    #allocation2 [shape = 'u8[4096]{0}', space=vmem, size = 0x1000, scoped, tag = 'input window, operand 0, single buffered']
    #allocation3 [shape = 's32[1]{0}', space=sflag, size = 0x4, scoped, tag = 'scoped memory for tpu_custom_call.1']
    #allocation4 [shape = 's32[1]{0}', space=sflag, size = 0x4, scoped, tag = 'scoped memory for tpu_custom_call.1']
    #allocation5 [shape = 'u8[8192]{0}', space=vmem, size = 0x2000, scoped, tag = 'input window, operand 1, single buffered']
    #allocation6 [shape = 's32[1]{0}', space=sflag, size = 0x4, scoped, tag = 'scoped memory for tpu_custom_call.1']
    #allocation7 [shape = 'u8[4096]{0}', space=vmem, size = 0x1000, scoped, tag = 'output window, operand 0, single buffered']
    #allocation8 [shape = 'u8[4096]{0}', space=vmem, size = 0x1000, scoped, tag = 'output window, operand 1, single buffered']
    #allocation9 [shape = 's32[1]{0}', space=sflag, size = 0x4, scoped, tag = 'scoped memory for tpu_custom_call.1']
    #allocation10 [shape = 'u8[4096]{0}', space=vmem, size = 0x1000, scoped, tag = 'output window, operand 2, single buffered']
    %10 = vsyncpa [#allocation3], 0
    %11 = vsyncpa [#allocation6], 0
    %12 = vsyncpa [#allocation4], 0
    %13 = vsyncpa [#allocation9], 0
    // Predicated region
    $region2: #{tpu_custom_call.1} parent=1 // pred_check
      _
    $region3: #{tpu_custom_call.1} parent=1 // pred_check_branch
      %15 = sbr.rel (0) target = $region5
    $region4: #{tpu_custom_call.1} parent=1 // pred_region
      %s17 = ssub.s32 128, 128
      %18 = vsyncadd [#allocation3], %s17
      %s20 = sshll.u32 [#allocation2], 4
      %s21 = int_to_ptr.vmem [resolvable:$true] %s20
      %23 = dma.hbm_to_vmem [thread:$0]  %s0, 128, %s21, [#allocation3]
    $region5: #{tpu_custom_call.1} parent=1 // pred_fallthru
      _
    // Predicated region
    $region6: #{tpu_custom_call.1} parent=1 // pred_check
      _
    $region7: #{tpu_custom_call.1} parent=1 // pred_check_branch
      %25 = sbr.rel (0) target = $region9
    $region8: #{tpu_custom_call.1} parent=1 // pred_region
      %s27 = ssub.s32 256, 256
      %28 = vsyncadd [#allocation6], %s27
      %s29 = sshll.u32 [#allocation5], 4
      %s30 = int_to_ptr.vmem [resolvable:$true] %s29
      %35 = dma.hbm_to_vmem [thread:$0]  %s1, 256, %s30, [#allocation6], 128, 128, 8
    $region9: #{tpu_custom_call.1} parent=1 // pred_fallthru
      _
    // Predicated region
    $region10: #{tpu_custom_call.1} parent=1 // pred_check
      _
    $region11: #{tpu_custom_call.1} parent=1 // pred_check_branch
      %37 = sbr.rel (0) target = $region13
    $region12: #{tpu_custom_call.1} parent=1 // pred_region
      %38 = dma.done [#allocation3], 128
    $region13: #{tpu_custom_call.1} parent=1 // pred_fallthru
      _
    // Predicated region
    $region14: #{tpu_custom_call.1} parent=1 // pred_check
      _
    $region15: #{tpu_custom_call.1} parent=1 // pred_check_branch
      %40 = sbr.rel (0) target = $region17
    $region16: #{tpu_custom_call.1} parent=1 // pred_region
      %41 = dma.done [#allocation6], 256
    $region17: #{tpu_custom_call.1} parent=1 // pred_fallthru
      _
    %v42 = vld [vmem:[#allocation2] sm:$0xff]
    %v43 = vld [vmem:[#allocation5] sm:$0xff]
    %v44 = vld [vmem:[#allocation5 + $0x8] sm:$0xff]
    %vm45 = vcmask 130048
    %v47 = vsel %vm45, %v42, 0
    %49 = vmatprep.subr.mxu0 0.0
    %50 = vmatpush1.msra.mxu0 0.0
    %51 = vmatprep.subr.mxu0 0.0
    %52 = vmatpush1.msra.mxu0 0.0
    %53 = vmatprep.subr.mxu0 0.0
    %54 = vmatpush1.msra.mxu0 0.0
    %55 = vmatprep.subr.mxu0 0.0
    %56 = vmatpush1.msra.mxu0 0.0
    %57 = vmatprep.subr.mxu0 0.0
    %58 = vmatpush1.msra.mxu0 0.0
    %59 = vmatprep.subr.mxu0 0.0
    %60 = vmatpush1.msra.mxu0 0.0
    %61 = vmatprep.subr.mxu0 0.0
    %62 = vmatpush1.msra.mxu0 0.0
    %63 = vmatprep.subr.mxu0 0.0
    %64 = vmatpush1.msra.mxu0 0.0
    %65 = vmatprep.subr.mxu0 0.0
    %66 = vmatpush1.msra.mxu0 0.0
    %67 = vmatprep.subr.mxu0 0.0
    %68 = vmatpush1.msra.mxu0 0.0
    %69 = vmatprep.subr.mxu0 0.0
    %70 = vmatpush1.msra.mxu0 0.0
    %71 = vmatprep.subr.mxu0 0.0
    %72 = vmatpush1.msra.mxu0 0.0
    %73 = vmatprep.subr.mxu0 0.0
    %74 = vmatpush1.msra.mxu0 0.0
    %75 = vmatprep.subr.mxu0 0.0
    %76 = vmatpush1.msra.mxu0 0.0
    %77 = vmatprep.subr.mxu0 0.0
    %78 = vmatpush1.msra.mxu0 %v44
    %79 = vmatprep.subr.mxu0 0.0
    %80 = vmatpush1.msra.mxu0 %v43
    %81 = vmatprep.subr.mxu0 0.0
    %82 = vmatpush2.msra.mxu0 0.0
    %83 = vmatprep.subr.mxu0 0.0
    %84 = vmatpush2.msra.mxu0 0.0
    %85 = vmatprep.subr.mxu0 0.0
    %86 = vmatpush2.msra.mxu0 0.0
    %87 = vmatprep.subr.mxu0 0.0
    %88 = vmatpush2.msra.mxu0 0.0
    %89 = vmatprep.subr.mxu0 0.0
    %90 = vmatpush2.msra.mxu0 0.0
    %91 = vmatprep.subr.mxu0 0.0
    %92 = vmatpush2.msra.mxu0 0.0
    %93 = vmatprep.subr.mxu0 0.0
    %94 = vmatpush2.msra.mxu0 0.0
    %95 = vmatprep.subr.mxu0 0.0
    %96 = vmatpush2.msra.mxu0 0.0
    %97 = vmatprep.subr.mxu0 0.0
    %98 = vmatpush2.msra.mxu0 0.0
    %99 = vmatprep.subr.mxu0 0.0
    %100 = vmatpush2.msra.mxu0 0.0
    %101 = vmatprep.subr.mxu0 0.0
    %102 = vmatpush2.msra.mxu0 0.0
    %103 = vmatprep.subr.mxu0 0.0
    %104 = vmatpush2.msra.mxu0 0.0
    %105 = vmatprep.subr.mxu0 0.0
    %106 = vmatpush2.msra.mxu0 0.0
    %107 = vmatprep.subr.mxu0 0.0
    %108 = vmatpush2.msra.mxu0 0.0
    %109 = vmatprep.subr.mxu0 0.0
    %110 = vmatpush2.msra.mxu0 0.0
    %111 = vmatprep.subr.mxu0 0.0
    %112 = vmatpush2.msra.mxu0 0.0
    %113 = vmatprep.mubr.f32.mxu0 0.0
    %114 = vmatmul.mubr.f32.gmra.mxu0 %v47
    %v115 = vpop.f32.mrf.mxu0
    %v116 = vadd.f32 0.0, %v115
    %v117 = vpop.f32.mrf.mxu0
    %118 = vdwg.mxu0
    %v119 = vmul.f32 %v116, 0.17677669
    %vm120 = vcmask 261120
    %121 = vst.msk [vmem:[#allocation7] sm:$0xff] %vm120, %v119
    %123 = vrot.lane.b32.xlu0 %v116, 96
    %v124 = vpop.permute.xlu0 %123
    %126 = vst.msk [vmem:[#allocation8] sm:$0xff] %vm120, %v124
    %127 = vrot.lane.b32.xlu0 %v116, 64
    %v128 = vpop.permute.xlu0 %127
    %130 = vst.msk [vmem:[#allocation10] sm:$0xff] %vm120, %v128
    // Predicated region
    $region18: #{tpu_custom_call.1} parent=1 // pred_check
      _
    $region19: #{tpu_custom_call.1} parent=1 // pred_check_branch
      %132 = sbr.rel (0) target = $region21
    $region20: #{tpu_custom_call.1} parent=1 // pred_region
      %s134 = ssub.s32 128, 128
      %135 = vsyncadd [#allocation4], %s134
      %s137 = sshll.u32 [#allocation7], 4
      %s138 = int_to_ptr.vmem [resolvable:$true] %s137
      %140 = dma.vmem_to_hbm [thread:$0]  %s138, 128, %s2, [#allocation4]
    $region21: #{tpu_custom_call.1} parent=1 // pred_fallthru
      _
    // Predicated region
    $region22: #{tpu_custom_call.1} parent=1 // pred_check
      _
    $region23: #{tpu_custom_call.1} parent=1 // pred_check_branch
      %142 = sbr.rel (0) target = $region25
    $region24: #{tpu_custom_call.1} parent=1 // pred_region
      %s144 = ssub.s32 128, 128
      %145 = vsyncadd [#allocation9], %s144
      %s147 = sshll.u32 [#allocation8], 4
      %s148 = int_to_ptr.vmem [resolvable:$true] %s147
      %150 = dma.vmem_to_hbm [thread:$0]  %s148, 128, %s3, [#allocation9]
    $region25: #{tpu_custom_call.1} parent=1 // pred_fallthru
      _
    // Predicated region
    $region26: #{tpu_custom_call.1} parent=1 // pred_check
      _
    $region27: #{tpu_custom_call.1} parent=1 // pred_check_branch
      %152 = sbr.rel (0) target = $region29
    $region28: #{tpu_custom_call.1} parent=1 // pred_region
      %s154 = ssub.s32 128, 128
      %155 = vsyncadd [#allocation9], %s154
      %s157 = sshll.u32 [#allocation10], 4
      %s158 = int_to_ptr.vmem [resolvable:$true] %s157
      %160 = dma.vmem_to_hbm [thread:$0]  %s158, 128, %s4, [#allocation9]
    $region29: #{tpu_custom_call.1} parent=1 // pred_fallthru
      _
    // Predicated region
    $region30: #{tpu_custom_call.1} parent=1 // pred_check
      _
    $region31: #{tpu_custom_call.1} parent=1 // pred_check_branch
      %162 = sbr.rel (0) target = $region33
    $region32: #{tpu_custom_call.1} parent=1 // pred_region
      %163 = dma.done [#allocation4], 128
    $region33: #{tpu_custom_call.1} parent=1 // pred_fallthru
      _
    // Predicated region
    $region34: #{tpu_custom_call.1} parent=1 // pred_check
      _
    $region35: #{tpu_custom_call.1} parent=1 // pred_check_branch
      %165 = sbr.rel (0) target = $region37
    $region36: #{tpu_custom_call.1} parent=1 // pred_region
      %166 = dma.done [#allocation9], 128
    $region37: #{tpu_custom_call.1} parent=1 // pred_fallthru
      _
    // Predicated region
    $region38: #{tpu_custom_call.1} parent=1 // pred_check
      _
    $region39: #{tpu_custom_call.1} parent=1 // pred_check_branch
      %168 = sbr.rel (0) target = $region41
    $region40: #{tpu_custom_call.1} parent=1 // pred_region
      %169 = dma.done [#allocation9], 128
    $region41: #{tpu_custom_call.1} parent=1 // pred_fallthru
      _
    %170 = vsyncpa [#allocation3], 1
    %171 = vsyncpa [#allocation6], 1
    %172 = vsyncpa [#allocation4], 1
    %173 = vsyncpa [#allocation9], 1

</llo_original>
